<compile_context>
chip_gen: v7x
topology: tpu7x:2x2x1
jax: 0.10.0
libtpu: 0.0.40
codegen_flags: <defaults>
</compile_context>

<pallas_src>
import functools

import jax
import jax.numpy as jnp
from jax.experimental import pallas as pl
from jax.experimental.pallas import tpu as pltpu


_VMEM_LIMIT_BYTES = 32 * 1024 * 1024  # safe on v5e/v6e (128 MiB) and v7x (64 MiB physical)
_TILE_M = 1024                        # rows of the im2col matmul per grid step


# ----------------------------------------------------------------------------
# Pallas kernels
# ----------------------------------------------------------------------------
def _conv_mm_kernel(p_ref, w_ref, b_ref, o_ref, *, relu_in, relu_out,
                    res_scale, res_slice):
    """Fused tile: (TM,K)bf16 @ (K,Cout)bf16 -> f32 bias / ReLU / residual epilogue."""
    p = p_ref[...]                                     # (TM, K) bf16
    pin = jnp.maximum(p, 0.0) if relu_in else p        # conv input is relu(x)
    acc = jnp.dot(pin, w_ref[...], preferred_element_type=jnp.float32)  # (TM, Cout) f32
    acc = acc + b_ref[...]                             # f32 bias add
    if relu_out:
        acc = jnp.maximum(acc, 0.0)
    if res_slice is not None:
        # Residual input == centre tap of the (pre-ReLU) patches (stride=1, 'same').
        start, size = res_slice
        resid = p[:, start:start + size].astype(jnp.float32)
        acc = resid + res_scale * acc
    o_ref[...] = acc.astype(o_ref.dtype)


def _head_vpu_kernel(p_ref, w_ref, b_ref, o_ref):
    """Cout == 1 head: VPU multiply + lane reduce (avoids an N=1 MXU matmul)."""
    p = p_ref[...].astype(jnp.float32)                 # (TM, K)
    w = w_ref[...]                                     # (1, K) f32
    acc = jnp.sum(p * w, axis=-1, keepdims=True)       # (TM, 1) f32
    o_ref[...] = (acc + b_ref[...]).astype(o_ref.dtype)


# ----------------------------------------------------------------------------
# Conv2d wrapper: im2col (plain-JAX glue) + tiled Pallas matmul (hot path)
# ----------------------------------------------------------------------------
def conv2d_pallas(x_nhwc, w_hwio, b, *, stride, pad, relu_in=False, relu_out=False,
                  res_scale=None, tile_m=_TILE_M):
    """x: (B,H,W,Cin) f32, w: (KH,KW,Cin,Cout), b: (Cout,). Returns (B,Hout,Wout,Cout) f32."""
    B, H, W, Cin = x_nhwc.shape
    KH, KW, _, Cout = w_hwio.shape
    Hout = (H + 2 * pad - KH) // stride + 1
    Wout = (W + 2 * pad - KW) // stride + 1
    M = B * Hout * Wout
    K = KH * KW * Cin

    # im2col: tap order (kh, kw, cin) matches w_hwio.reshape(K, Cout). bf16 halves
    # HBM traffic for the dominant patches read; accumulation stays f32 in-kernel.
    xp = jnp.pad(x_nhwc, ((0, 0), (pad, pad), (pad, pad), (0, 0)))
    cols = []
    for kh in range(KH):
        for kw in range(KW):
            cols.append(xp[:, kh:kh + stride * Hout:stride,
                            kw:kw + stride * Wout:stride, :])
    patches = jnp.concatenate(cols, axis=-1).reshape(M, K).astype(jnp.bfloat16)
    b_mat = b.reshape(1, Cout).astype(jnp.float32)

    use_vpu_head = (Cout == 1)
    if use_vpu_head:
        assert not relu_in and not relu_out and res_scale is None
        w_mat = w_hwio.reshape(K, 1).T.astype(jnp.float32)        # (1, K) f32
        kern = _head_vpu_kernel
        flops = 2 * M * K
    else:
        w_mat = w_hwio.reshape(K, Cout).astype(jnp.bfloat16)      # (K, Cout) bf16
        res_slice = None
        if res_scale is not None:
            # Centre-tap residual is only valid for stride=1, odd k, symmetric 'same' pad.
            assert stride == 1 and KH % 2 == 1 and KW % 2 == 1 and pad == KH // 2
            assert Cin == Cout
            res_slice = (((KH // 2) * KW + (KW // 2)) * Cin, Cin)
        kern = functools.partial(
            _conv_mm_kernel, relu_in=relu_in, relu_out=relu_out,
            res_scale=None if res_scale is None else float(res_scale),
            res_slice=res_slice)
        flops = 2 * M * K * Cout

    # M-tiling: full dim when small (always legal), else a multiple-of-8 tile with
    # boundary masking handled by Pallas.
    TM = min(tile_m, M)
    grid = (pl.cdiv(M, TM),)

    bytes_accessed = (patches.size * patches.dtype.itemsize
                      + w_mat.size * w_mat.dtype.itemsize
                      + b_mat.size * b_mat.dtype.itemsize
                      + M * Cout * 4)

    out = pl.pallas_call(
        kern,
        out_shape=jax.ShapeDtypeStruct((M, Cout), jnp.float32),
        grid=grid,
        in_specs=[
            pl.BlockSpec((TM, K), lambda i: (i, 0)),          # streamed patch tiles
            pl.BlockSpec(w_mat.shape, lambda i: (0, 0)),      # weights stay resident
            pl.BlockSpec((1, Cout), lambda i: (0, 0)),        # bias stays resident
        ],
        out_specs=pl.BlockSpec((TM, Cout), lambda i: (i, 0)),
        compiler_params=pltpu.CompilerParams(
            dimension_semantics=("parallel",),
            vmem_limit_bytes=_VMEM_LIMIT_BYTES),
        cost_estimate=pl.CostEstimate(flops=int(flops), transcendentals=0,
                                      bytes_accessed=int(bytes_accessed)),
    )(patches, w_mat, b_mat)

    return out.reshape(B, Hout, Wout, Cout)


# ----------------------------------------------------------------------------
# Parameter construction (deterministic, PyTorch Conv2d-style uniform init)
# ----------------------------------------------------------------------------
def _init_conv(key, k, cin, cout):
    kw_key, kb_key = jax.random.split(key)
    fan_in = cin * k * k
    bound = 1.0 / jnp.sqrt(fan_in)
    w = jax.random.uniform(kw_key, (k, k, cin, cout), jnp.float32, -bound, bound)
    b = jax.random.uniform(kb_key, (cout,), jnp.float32, -bound, bound)
    return w, b


def make_discriminator_params(key, *, in_channels, n_conv_layers, n_res_layers,
                              n_hidden, kernel_size):
    params = {"enc": [], "res": []}
    keys = jax.random.split(key, n_conv_layers + n_res_layers + 1)
    ki = 0
    cin = in_channels
    for _ in range(n_conv_layers):
        params["enc"].append(_init_conv(keys[ki], kernel_size, cin, n_hidden))
        cin = n_hidden
        ki += 1
    for _ in range(n_res_layers):
        params["res"].append(_init_conv(keys[ki], kernel_size, n_hidden, n_hidden))
        ki += 1
    params["head"] = _init_conv(keys[ki], kernel_size, n_hidden, 1)
    return params


# ----------------------------------------------------------------------------
# Discriminator forward (accepts PyTorch-style NCHW input)
# ----------------------------------------------------------------------------
def discriminator_forward(params, x_nchw, *, kernel_size, res_multiplier):
    k = kernel_size
    pad_same = (k - 1) // 2            # odd kernel => symmetric 'same' padding
    x = jnp.transpose(x_nchw, (0, 2, 3, 1))  # NCHW -> NHWC

    # Encoder: strided downsampling convs with fused ReLU.
    for (w, b) in params["enc"]:
        x = conv2d_pallas(x, w, b, stride=2, pad=k // 2, relu_out=True)

    # Residual stack: x = x + res_multiplier * conv(relu(x)); relu + residual fused
    # in-kernel, residual taken from the centre tap of the patches (no extra operand).
    for (w, b) in params["res"]:
        x = conv2d_pallas(x, w, b, stride=1, pad=pad_same,
                          relu_in=True, res_scale=res_multiplier)

    # Head: n_hidden -> 1, 'same' padding (VPU dot), then .squeeze() like torch.
    w, b = params["head"]
    x = conv2d_pallas(x, w, b, stride=1, pad=pad_same)   # (B, H', W', 1)
    return jnp.squeeze(x)


# ----------------------------------------------------------------------------
# Demo
# ----------------------------------------------------------------------------
if __name__ == "__main__":
    B, C, H, W = 2, 3, 16, 16
    n_conv_layers = 2
    n_res_layers = 2
    n_hidden = 32
    kernel_size = 3
    res_multiplier = 0.5

    root = jax.random.PRNGKey(0)
    pkey, xkey = jax.random.split(root)
    params = make_discriminator_params(
        pkey, in_channels=C, n_conv_layers=n_conv_layers,
        n_res_layers=n_res_layers, n_hidden=n_hidden, kernel_size=kernel_size)

    x = jax.random.normal(xkey, (B, C, H, W), jnp.float32)  # PyTorch-style NCHW

    fwd = jax.jit(functools.partial(discriminator_forward,
                                    kernel_size=kernel_size,
                                    res_multiplier=res_multiplier))
    out = fwd(params, x)
    jax.block_until_ready(out)

    # Two stride-2 layers: 16 -> 8 -> 4; head outputs 1 channel, squeezed away.
    assert out.shape == (B, H // 4, W // 4), out.shape
    assert out.dtype == jnp.float32
    assert bool(jnp.all(jnp.isfinite(out)))
    print("KERNEL_OK")
</pallas_src>

<mosaic_0001>
module attributes {stable_mosaic.version = 11 : i64} {
  func.func @_conv_mm_kernel(%arg0: i32, %arg1: memref<128x27xbf16, #tpu.memory_space<vmem>>, %arg2: memref<27x32xbf16, #tpu.memory_space<vmem>>, %arg3: memref<1x32xf32, #tpu.memory_space<vmem>>, %arg4: memref<128x32xf32, #tpu.memory_space<vmem>>) attributes {dimension_semantics = [#tpu.dimension_semantics<parallel>], iteration_bounds = array<i64: 1>, scalar_prefetch = 0 : i64, scratch_operands = 0 : i64, tpu.core_type = #tpu.core_type<tc>, window_params = [{transform_indices = @transform_0, window_bounds = array<i64: 128, 27>}, {pipeline_mode = #tpu.pipeline_mode<synchronous>, transform_indices = @transform_1, window_bounds = array<i64: 27, 32>}, {pipeline_mode = #tpu.pipeline_mode<synchronous>, transform_indices = @transform_2, window_bounds = array<i64: 1, 32>}, {transform_indices = @transform_3, window_bounds = array<i64: 128, 32>}]} {
    %c0 = arith.constant 0 : index
    %c0_0 = arith.constant 0 : index
    %0 = vector.load %arg1[%c0, %c0_0] : memref<128x27xbf16, #tpu.memory_space<vmem>>, vector<128x27xbf16>
    %c0_1 = arith.constant 0 : index
    %c0_2 = arith.constant 0 : index
    %1 = vector.load %arg2[%c0_1, %c0_2] : memref<27x32xbf16, #tpu.memory_space<vmem>>, vector<27x32xbf16>
    %cst = arith.constant dense<0.000000e+00> : vector<128x32xf32>
    %2 = tpu.matmul %0, %1, %cst {dimension_numbers = #tpu.dot_dimension_numbers<[1], [0], [0], [1], [0, 0, 1, 1], [], []>} : vector<128x27xbf16>, vector<27x32xbf16>, vector<128x32xf32> -> vector<128x32xf32>
    %c0_3 = arith.constant 0 : index
    %c0_4 = arith.constant 0 : index
    %3 = vector.load %arg3[%c0_3, %c0_4] : memref<1x32xf32, #tpu.memory_space<vmem>>, vector<1x32xf32>
    %4 = vector.broadcast %3 : vector<1x32xf32> to vector<128x32xf32>
    %5 = arith.addf %2, %4 : vector<128x32xf32>
    %cst_5 = arith.constant 0.000000e+00 : f32
    %6 = vector.broadcast %cst_5 : f32 to vector<128x32xf32>
    %7 = arith.maximumf %5, %6 : vector<128x32xf32>
    %c0_6 = arith.constant 0 : index
    %c0_7 = arith.constant 0 : index
    %8 = vector.load %arg4[%c0_6, %c0_7] : memref<128x32xf32, #tpu.memory_space<vmem>>, vector<128x32xf32>
    tpu.vector_store %arg4[%c0_6, %c0_7], %7 {strides = array<i32>} : memref<128x32xf32, #tpu.memory_space<vmem>>, vector<128x32xf32>,
    return
  }
  func.func @transform_0(%arg0: i32) -> (i32, i32) {
    %c0_i32 = arith.constant 0 : i32
    %c0_i32_0 = arith.constant 0 : i32
    return %arg0, %c0_i32 : i32, i32
  }
  func.func @transform_1(%arg0: i32) -> (i32, i32) {
    %c0_i32 = arith.constant 0 : i32
    %c0_i32_0 = arith.constant 0 : i32
    %c0_i32_1 = arith.constant 0 : i32
    return %c0_i32, %c0_i32_0 : i32, i32
  }
  func.func @transform_2(%arg0: i32) -> (i32, i32) {
    %c0_i32 = arith.constant 0 : i32
    %c0_i32_0 = arith.constant 0 : i32
    %c0_i32_1 = arith.constant 0 : i32
    return %c0_i32, %c0_i32_0 : i32, i32
  }
  func.func @transform_3(%arg0: i32) -> (i32, i32) {
    %c0_i32 = arith.constant 0 : i32
    %c0_i32_0 = arith.constant 0 : i32
    return %arg0, %c0_i32 : i32, i32
  }
}

module attributes {stable_mosaic.version = 11 : i64} {
  func.func @_conv_mm_kernel(%arg0: i32, %arg1: memref<32x288xbf16, #tpu.memory_space<vmem>>, %arg2: memref<288x32xbf16, #tpu.memory_space<vmem>>, %arg3: memref<1x32xf32, #tpu.memory_space<vmem>>, %arg4: memref<32x32xf32, #tpu.memory_space<vmem>>) attributes {dimension_semantics = [#tpu.dimension_semantics<parallel>], iteration_bounds = array<i64: 1>, scalar_prefetch = 0 : i64, scratch_operands = 0 : i64, tpu.core_type = #tpu.core_type<tc>, window_params = [{transform_indices = @transform_0, window_bounds = array<i64: 32, 288>}, {pipeline_mode = #tpu.pipeline_mode<synchronous>, transform_indices = @transform_1, window_bounds = array<i64: 288, 32>}, {pipeline_mode = #tpu.pipeline_mode<synchronous>, transform_indices = @transform_2, window_bounds = array<i64: 1, 32>}, {transform_indices = @transform_3, window_bounds = array<i64: 32, 32>}]} {
    %c0 = arith.constant 0 : index
    %c0_0 = arith.constant 0 : index
    %0 = vector.load %arg1[%c0, %c0_0] : memref<32x288xbf16, #tpu.memory_space<vmem>>, vector<32x288xbf16>
    %c0_1 = arith.constant 0 : index
    %c0_2 = arith.constant 0 : index
    %1 = vector.load %arg2[%c0_1, %c0_2] : memref<288x32xbf16, #tpu.memory_space<vmem>>, vector<288x32xbf16>
    %cst = arith.constant dense<0.000000e+00> : vector<32x32xf32>
    %2 = tpu.matmul %0, %1, %cst {dimension_numbers = #tpu.dot_dimension_numbers<[1], [0], [0], [1], [0, 0, 1, 1], [], []>} : vector<32x288xbf16>, vector<288x32xbf16>, vector<32x32xf32> -> vector<32x32xf32>
    %c0_3 = arith.constant 0 : index
    %c0_4 = arith.constant 0 : index
    %3 = vector.load %arg3[%c0_3, %c0_4] : memref<1x32xf32, #tpu.memory_space<vmem>>, vector<1x32xf32>
    %4 = vector.broadcast %3 : vector<1x32xf32> to vector<32x32xf32>
    %5 = arith.addf %2, %4 : vector<32x32xf32>
    %cst_5 = arith.constant 0.000000e+00 : f32
    %6 = vector.broadcast %cst_5 : f32 to vector<32x32xf32>
    %7 = arith.maximumf %5, %6 : vector<32x32xf32>
    %c0_6 = arith.constant 0 : index
    %c0_7 = arith.constant 0 : index
    %8 = vector.load %arg4[%c0_6, %c0_7] : memref<32x32xf32, #tpu.memory_space<vmem>>, vector<32x32xf32>
    tpu.vector_store %arg4[%c0_6, %c0_7], %7 {strides = array<i32>} : memref<32x32xf32, #tpu.memory_space<vmem>>, vector<32x32xf32>,
    return
  }
  func.func @transform_0(%arg0: i32) -> (i32, i32) {
    %c0_i32 = arith.constant 0 : i32
    %c0_i32_0 = arith.constant 0 : i32
    return %arg0, %c0_i32 : i32, i32
  }
  func.func @transform_1(%arg0: i32) -> (i32, i32) {
    %c0_i32 = arith.constant 0 : i32
    %c0_i32_0 = arith.constant 0 : i32
    %c0_i32_1 = arith.constant 0 : i32
    return %c0_i32, %c0_i32_0 : i32, i32
  }
  func.func @transform_2(%arg0: i32) -> (i32, i32) {
    %c0_i32 = arith.constant 0 : i32
    %c0_i32_0 = arith.constant 0 : i32
    %c0_i32_1 = arith.constant 0 : i32
    return %c0_i32, %c0_i32_0 : i32, i32
  }
  func.func @transform_3(%arg0: i32) -> (i32, i32) {
    %c0_i32 = arith.constant 0 : i32
    %c0_i32_0 = arith.constant 0 : i32
    return %arg0, %c0_i32 : i32, i32
  }
}

module attributes {stable_mosaic.version = 11 : i64} {
  func.func @_conv_mm_kernel(%arg0: i32, %arg1: memref<32x288xbf16, #tpu.memory_space<vmem>>, %arg2: memref<288x32xbf16, #tpu.memory_space<vmem>>, %arg3: memref<1x32xf32, #tpu.memory_space<vmem>>, %arg4: memref<32x32xf32, #tpu.memory_space<vmem>>) attributes {dimension_semantics = [#tpu.dimension_semantics<parallel>], iteration_bounds = array<i64: 1>, scalar_prefetch = 0 : i64, scratch_operands = 0 : i64, tpu.core_type = #tpu.core_type<tc>, window_params = [{transform_indices = @transform_0, window_bounds = array<i64: 32, 288>}, {pipeline_mode = #tpu.pipeline_mode<synchronous>, transform_indices = @transform_1, window_bounds = array<i64: 288, 32>}, {pipeline_mode = #tpu.pipeline_mode<synchronous>, transform_indices = @transform_2, window_bounds = array<i64: 1, 32>}, {transform_indices = @transform_3, window_bounds = array<i64: 32, 32>}]} {
    %c0 = arith.constant 0 : index
    %c0_0 = arith.constant 0 : index
    %0 = vector.load %arg1[%c0, %c0_0] : memref<32x288xbf16, #tpu.memory_space<vmem>>, vector<32x288xbf16>
    %cst = arith.constant 0.000000e+00 : bf16
    %1 = vector.broadcast %cst : bf16 to vector<32x288xbf16>
    %2 = arith.maximumf %0, %1 : vector<32x288xbf16>
    %c0_1 = arith.constant 0 : index
    %c0_2 = arith.constant 0 : index
    %3 = vector.load %arg2[%c0_1, %c0_2] : memref<288x32xbf16, #tpu.memory_space<vmem>>, vector<288x32xbf16>
    %cst_3 = arith.constant dense<0.000000e+00> : vector<32x32xf32>
    %4 = tpu.matmul %2, %3, %cst_3 {dimension_numbers = #tpu.dot_dimension_numbers<[1], [0], [0], [1], [0, 0, 1, 1], [], []>} : vector<32x288xbf16>, vector<288x32xbf16>, vector<32x32xf32> -> vector<32x32xf32>
    %c0_4 = arith.constant 0 : index
    %c0_5 = arith.constant 0 : index
    %5 = vector.load %arg3[%c0_4, %c0_5] : memref<1x32xf32, #tpu.memory_space<vmem>>, vector<1x32xf32>
    %6 = vector.broadcast %5 : vector<1x32xf32> to vector<32x32xf32>
    %7 = arith.addf %4, %6 : vector<32x32xf32>
    %8 = vector.extract_strided_slice %0 {offsets = [0, 128], sizes = [32, 32], strides = [1, 1]} : vector<32x288xbf16> to vector<32x32xbf16>
    %9 = arith.extf %8 : vector<32x32xbf16> to vector<32x32xf32>
    %cst_6 = arith.constant 5.000000e-01 : f32
    %10 = vector.broadcast %cst_6 : f32 to vector<32x32xf32>
    %11 = arith.mulf %10, %7 : vector<32x32xf32>
    %12 = arith.addf %9, %11 : vector<32x32xf32>
    %c0_7 = arith.constant 0 : index
    %c0_8 = arith.constant 0 : index
    %13 = vector.load %arg4[%c0_7, %c0_8] : memref<32x32xf32, #tpu.memory_space<vmem>>, vector<32x32xf32>
    tpu.vector_store %arg4[%c0_7, %c0_8], %12 {strides = array<i32>} : memref<32x32xf32, #tpu.memory_space<vmem>>, vector<32x32xf32>,
    return
  }
  func.func @transform_0(%arg0: i32) -> (i32, i32) {
    %c0_i32 = arith.constant 0 : i32
    %c0_i32_0 = arith.constant 0 : i32
    return %arg0, %c0_i32 : i32, i32
  }
  func.func @transform_1(%arg0: i32) -> (i32, i32) {
    %c0_i32 = arith.constant 0 : i32
    %c0_i32_0 = arith.constant 0 : i32
    %c0_i32_1 = arith.constant 0 : i32
    return %c0_i32, %c0_i32_0 : i32, i32
  }
  func.func @transform_2(%arg0: i32) -> (i32, i32) {
    %c0_i32 = arith.constant 0 : i32
    %c0_i32_0 = arith.constant 0 : i32
    %c0_i32_1 = arith.constant 0 : i32
    return %c0_i32, %c0_i32_0 : i32, i32
  }
  func.func @transform_3(%arg0: i32) -> (i32, i32) {
    %c0_i32 = arith.constant 0 : i32
    %c0_i32_0 = arith.constant 0 : i32
    return %arg0, %c0_i32 : i32, i32
  }
}

module attributes {stable_mosaic.version = 11 : i64} {
  func.func @_head_vpu_kernel(%arg0: i32, %arg1: memref<32x288xbf16, #tpu.memory_space<vmem>>, %arg2: memref<1x288xf32, #tpu.memory_space<vmem>>, %arg3: memref<1x1xf32, #tpu.memory_space<vmem>>, %arg4: memref<32x1xf32, #tpu.memory_space<vmem>>) attributes {dimension_semantics = [#tpu.dimension_semantics<parallel>], iteration_bounds = array<i64: 1>, scalar_prefetch = 0 : i64, scratch_operands = 0 : i64, tpu.core_type = #tpu.core_type<tc>, window_params = [{transform_indices = @transform_0, window_bounds = array<i64: 32, 288>}, {pipeline_mode = #tpu.pipeline_mode<synchronous>, transform_indices = @transform_1, window_bounds = array<i64: 1, 288>}, {pipeline_mode = #tpu.pipeline_mode<synchronous>, transform_indices = @transform_2, window_bounds = array<i64: 1, 1>}, {transform_indices = @transform_3, window_bounds = array<i64: 32, 1>}]} {
    %c0 = arith.constant 0 : index
    %c0_0 = arith.constant 0 : index
    %0 = vector.load %arg1[%c0, %c0_0] : memref<32x288xbf16, #tpu.memory_space<vmem>>, vector<32x288xbf16>
    %1 = arith.extf %0 : vector<32x288xbf16> to vector<32x288xf32>
    %c0_1 = arith.constant 0 : index
    %c0_2 = arith.constant 0 : index
    %2 = vector.load %arg2[%c0_1, %c0_2] : memref<1x288xf32, #tpu.memory_space<vmem>>, vector<1x288xf32>
    %3 = vector.broadcast %2 : vector<1x288xf32> to vector<32x288xf32>
    %4 = arith.mulf %1, %3 : vector<32x288xf32>
    %cst = arith.constant dense<0.000000e+00> : vector<32xf32>
    %5 = vector.multi_reduction <add>, %4, %cst [1] : vector<32x288xf32> to vector<32xf32>
    %6 = vector.shape_cast %5 : vector<32xf32> to vector<32x1xf32>
    %c0_3 = arith.constant 0 : index
    %c0_4 = arith.constant 0 : index
    %7 = vector.load %arg3[%c0_3, %c0_4] : memref<1x1xf32, #tpu.memory_space<vmem>>, vector<1x1xf32>
    %8 = vector.broadcast %7 : vector<1x1xf32> to vector<32x1xf32>
    %9 = arith.addf %6, %8 : vector<32x1xf32>
    %c0_5 = arith.constant 0 : index
    %c0_6 = arith.constant 0 : index
    %10 = vector.load %arg4[%c0_5, %c0_6] : memref<32x1xf32, #tpu.memory_space<vmem>>, vector<32x1xf32>
    tpu.vector_store %arg4[%c0_5, %c0_6], %9 {strides = array<i32>} : memref<32x1xf32, #tpu.memory_space<vmem>>, vector<32x1xf32>,
    return
  }
  func.func @transform_0(%arg0: i32) -> (i32, i32) {
    %c0_i32 = arith.constant 0 : i32
    %c0_i32_0 = arith.constant 0 : i32
    return %arg0, %c0_i32 : i32, i32
  }
  func.func @transform_1(%arg0: i32) -> (i32, i32) {
    %c0_i32 = arith.constant 0 : i32
    %c0_i32_0 = arith.constant 0 : i32
    %c0_i32_1 = arith.constant 0 : i32
    return %c0_i32, %c0_i32_0 : i32, i32
  }
  func.func @transform_2(%arg0: i32) -> (i32, i32) {
    %c0_i32 = arith.constant 0 : i32
    %c0_i32_0 = arith.constant 0 : i32
    %c0_i32_1 = arith.constant 0 : i32
    return %c0_i32, %c0_i32_0 : i32, i32
  }
  func.func @transform_3(%arg0: i32) -> (i32, i32) {
    %c0_i32 = arith.constant 0 : i32
    %c0_i32_0 = arith.constant 0 : i32
    return %arg0, %c0_i32 : i32, i32
  }
}

</mosaic_0001>

<llo_original>
// kernel: discriminator_forward.5
$region0: #{discriminator_forward.5}
  #allocation0 [shape = 'u32[]', space=smem, size = 0x4, offset = 0x4, fixed_abs, tag = 'smem constant byte address 0x4 - core index']
  #allocation1 [shape = 'u32[144,128]{1,0:T(1,128)}', space=vmem, size = 0x12000, scoped, tag = 'internal scratch']
  %s0 = inlined_call_operand.vmem [shape: bf16[128,27], index: 0, kind: input, shape index: {}]
  %s1 = inlined_call_operand.vmem [shape: bf16[27,32], index: 1, kind: input, shape index: {}]
  %s2 = inlined_call_operand.vmem [shape: f32[1,32], index: 2, kind: input, shape index: {}]
  %s3 = inlined_call_operand.vmem [shape: f32[128,32], index: 3, kind: output, shape index: {}]
  %s4 = sld [smem:[#allocation0]]
  $region22: #{discriminator_forward.5} parent=0
    _
  %s6 = ssub.s32 1, %s4
  %s7 = scalar_select 0, %s6, %s4
  // Predicated region
  $region2: #{discriminator_forward.5} parent=0 // pred_check
    _
  $region3: #{discriminator_forward.5} parent=0 // pred_check_branch
    %9 = sbr.rel (0) target = $region5
  $region4: #{discriminator_forward.5} parent=0 // pred_region
    _
  $region5: #{discriminator_forward.5} parent=0 // pred_fallthru
    _
  // Predicated region
  $region6: #{discriminator_forward.5} parent=0 // pred_check
    _
  $region7: #{discriminator_forward.5} parent=0 // pred_check_branch
    %11 = sbr.rel (0) target = $region9
  $region8: #{discriminator_forward.5} parent=0 // pred_region
    _
  $region9: #{discriminator_forward.5} parent=0 // pred_fallthru
    _
  // Predicated region
  $region10: #{discriminator_forward.5} parent=0 // pred_check
    _
  $region11: #{discriminator_forward.5} parent=0 // pred_check_branch
    %13 = sbr.rel (0) target = $region13
  $region12: #{discriminator_forward.5} parent=0 // pred_region
    _
  $region13: #{discriminator_forward.5} parent=0 // pred_fallthru
    _
  %v15 = vld [vmem:[%s0] sm:$0xf]
  %v16 = vld [vmem:[%s0 + $0x4] sm:$0xf]
  %v17 = vld [vmem:[%s0 + $0x8] sm:$0xf]
  %v18 = vld [vmem:[%s0 + $0xc] sm:$0xf]
  %v19 = vld [vmem:[%s0 + $0x10] sm:$0xf]
  %v20 = vld [vmem:[%s0 + $0x14] sm:$0xf]
  %v21 = vld [vmem:[%s0 + $0x18] sm:$0xf]
  %v22 = vld [vmem:[%s0 + $0x1c] sm:$0xf]
  %v23 = vld [vmem:[%s0 + $0x20] sm:$0xf]
  %v24 = vld [vmem:[%s0 + $0x24] sm:$0xf]
  %v25 = vld [vmem:[%s0 + $0x28] sm:$0xf]
  %v26 = vld [vmem:[%s0 + $0x2c] sm:$0xf]
  %v27 = vld [vmem:[%s0 + $0x30] sm:$0xf]
  %v28 = vld [vmem:[%s0 + $0x34] sm:$0xf]
  %v29 = vld [vmem:[%s0 + $0x38] sm:$0xf]
  %v30 = vld [vmem:[%s0 + $0x3c] sm:$0xf]
  %v31 = vld [vmem:[%s1] sm:$0xf]
  %v32 = vld [vmem:[%s1 + $0x4] sm:$0xf]
  %v33 = vld [vmem:[%s1 + $0x8] sm:$0xf]
  %v34 = vld [vmem:[%s1 + $0xc] sm:$0x3]
  %v35 = vld [vmem:[%s2] sm:$0x1]
  %v37 = vlaneseq
  %v38 = vshrl.u32 %v37, 7
  %v39 = vsub.s32 0, %v38
  %v40 = vrot.slane %v35, %v39
  %v58 = vunpack.c.l.b16 %v15
  %v59 = vunpack.c.l.b16 %v16
  %v60 = vunpack.c.l.b16 %v17
  %v61 = vunpack.c.l.b16 %v18
  %v62 = vunpack.c.l.b16 %v19
  %v63 = vunpack.c.l.b16 %v20
  %v64 = vunpack.c.l.b16 %v21
  %v65 = vunpack.c.l.b16 %v22
  %v66 = vunpack.c.l.b16 %v23
  %v67 = vunpack.c.l.b16 %v24
  %v68 = vunpack.c.l.b16 %v25
  %v69 = vunpack.c.l.b16 %v26
  %v70 = vunpack.c.l.b16 %v27
  %v71 = vunpack.c.l.b16 %v28
  %v72 = vunpack.c.l.b16 %v29
  %v73 = vunpack.c.l.b16 %v30
  %v74 = vpack.c.b16 %v59, %v58
  %v75 = vpack.c.b16 %v61, %v60
  %v76 = vpack.c.b16 %v63, %v62
  %v77 = vpack.c.b16 %v65, %v64
  %v78 = vpack.c.b16 %v67, %v66
  %v79 = vpack.c.b16 %v69, %v68
  %v80 = vpack.c.b16 %v71, %v70
  %v81 = vpack.c.b16 %v73, %v72
  %v86 = vunpack.c.l.b16 %v31
  %v87 = vunpack.c.l.b16 %v32
  %v88 = vunpack.c.l.b16 %v33
  %v89 = vunpack.c.l.b16 %v34
  %v90 = vpack.c.b16 %v87, %v86
  %v91 = vpack.c.b16 %v89, %v88
  %vm93 = vcmask 220160
  %v95 = vsel %vm93, %v74, 0
  %v98 = vsel %vm93, %v75, 0
  %v101 = vsel %vm93, %v76, 0
  %v104 = vsel %vm93, %v77, 0
  %v107 = vsel %vm93, %v78, 0
  %v110 = vsel %vm93, %v79, 0
  %v113 = vsel %vm93, %v80, 0
  %v116 = vsel %vm93, %v81, 0
  %vm118 = vcmask 1044480
  %vm119 = vcmask 1045504
  %v120 = vsel %vm118, 4294967295, 65535
  %v121 = vsel %vm119, %v120, 0
  %v123 = vand.u32 %v91, %v121
  %125 = vmatprep.subr.bf16.mxu0 0
  %126 = vmatpush1.bf16.msra.mxu0 %v90
  %127 = vmatprep.subr.bf16.mxu0 0
  %128 = vmatpush1.bf16.msra.mxu0 %v123
  %129 = vmatprep.subr.bf16.mxu0 0
  %130 = vmatpush1.bf16.msra.mxu0 0
  %131 = vmatprep.subr.bf16.mxu0 0
  %132 = vmatpush1.bf16.msra.mxu0 0
  %133 = vmatprep.subr.bf16.mxu0 0
  %134 = vmatpush1.bf16.msra.mxu0 0
  %135 = vmatprep.subr.bf16.mxu0 0
  %136 = vmatpush1.bf16.msra.mxu0 0
  %137 = vmatprep.subr.bf16.mxu0 0
  %138 = vmatpush1.bf16.msra.mxu0 0
  %139 = vmatprep.subr.bf16.mxu0 0
  %140 = vmatpush1.bf16.msra.mxu0 0
  %141 = vmatprep.subr.bf16.mxu0 0
  %142 = vmatpush1.bf16.msra.mxu0 0
  %143 = vmatprep.subr.bf16.mxu0 0
  %144 = vmatpush1.bf16.msra.mxu0 0
  %145 = vmatprep.subr.bf16.mxu0 0
  %146 = vmatpush1.bf16.msra.mxu0 0
  %147 = vmatprep.subr.bf16.mxu0 0
  %148 = vmatpush1.bf16.msra.mxu0 0
  %149 = vmatprep.subr.bf16.mxu0 0
  %150 = vmatpush1.bf16.msra.mxu0 0
  %151 = vmatprep.subr.bf16.mxu0 0
  %152 = vmatpush1.bf16.msra.mxu0 0
  %153 = vmatprep.subr.bf16.mxu0 0
  %154 = vmatpush1.bf16.msra.mxu0 0
  %155 = vmatprep.subr.bf16.mxu0 0
  %156 = vmatpush1.bf16.msra.mxu0 0
  %157 = vmatprep.mubr.bf16.mxu0 0
  %158 = vmatmul.mubr.bf16.gmra.mrb[0].mxu0 %v95
  %v159 = vpop.f32.mrb[0].mxu0
  %v160 = vadd.f32 %v40, %v159
  %v161 = vpop.f32.mrb[0].mxu0
  %v162 = vpop.f32.mrb[0].mxu0
  %v163 = vadd.f32 %v40, %v162
  %v164 = vpop.f32.mrb[0].mxu0
  %165 = vmatprep.mubr.bf16.mxu0 0
  %166 = vmatmul.mubr.bf16.gmra.mrb[0].mxu0 %v98
  %v167 = vpop.f32.mrb[0].mxu0
  %v168 = vadd.f32 %v40, %v167
  %v169 = vpop.f32.mrb[0].mxu0
  %v170 = vpop.f32.mrb[0].mxu0
  %v171 = vadd.f32 %v40, %v170
  %v172 = vpop.f32.mrb[0].mxu0
  %173 = vmatprep.mubr.bf16.mxu0 0
  %174 = vmatmul.mubr.bf16.gmra.mrb[0].mxu0 %v101
  %v175 = vpop.f32.mrb[0].mxu0
  %v176 = vadd.f32 %v40, %v175
  %v177 = vpop.f32.mrb[0].mxu0
  %v178 = vpop.f32.mrb[0].mxu0
  %v179 = vadd.f32 %v40, %v178
  %v180 = vpop.f32.mrb[0].mxu0
  %181 = vmatprep.mubr.bf16.mxu0 0
  %182 = vmatmul.mubr.bf16.gmra.mrb[0].mxu0 %v104
  %v183 = vpop.f32.mrb[0].mxu0
  %v184 = vadd.f32 %v40, %v183
  %v185 = vpop.f32.mrb[0].mxu0
  %v186 = vpop.f32.mrb[0].mxu0
  %v187 = vadd.f32 %v40, %v186
  %v188 = vpop.f32.mrb[0].mxu0
  %189 = vmatprep.mubr.bf16.mxu0 0
  %190 = vmatmul.mubr.bf16.gmra.mrb[0].mxu0 %v107
  %v191 = vpop.f32.mrb[0].mxu0
  %v192 = vadd.f32 %v40, %v191
  %v193 = vpop.f32.mrb[0].mxu0
  %v194 = vpop.f32.mrb[0].mxu0
  %v195 = vadd.f32 %v40, %v194
  %v196 = vpop.f32.mrb[0].mxu0
  %197 = vmatprep.mubr.bf16.mxu0 0
  %198 = vmatmul.mubr.bf16.gmra.mrb[0].mxu0 %v110
  %v199 = vpop.f32.mrb[0].mxu0
  %v200 = vadd.f32 %v40, %v199
  %v201 = vpop.f32.mrb[0].mxu0
  %v202 = vpop.f32.mrb[0].mxu0
  %v203 = vadd.f32 %v40, %v202
  %v204 = vpop.f32.mrb[0].mxu0
  %205 = vmatprep.mubr.bf16.mxu0 0
  %206 = vmatmul.mubr.bf16.gmra.mrb[0].mxu0 %v113
  %v207 = vpop.f32.mrb[0].mxu0
  %v208 = vadd.f32 %v40, %v207
  %v209 = vpop.f32.mrb[0].mxu0
  %v210 = vpop.f32.mrb[0].mxu0
  %v211 = vadd.f32 %v40, %v210
  %v212 = vpop.f32.mrb[0].mxu0
  %213 = vmatprep.mubr.bf16.mxu0 0
  %214 = vmatmul.mubr.bf16.gmra.mrb[0].mxu0 %v116
  %v215 = vpop.f32.mrb[0].mxu0
  %v216 = vadd.f32 %v40, %v215
  %v217 = vpop.f32.mrb[0].mxu0
  %v218 = vpop.f32.mrb[0].mxu0
  %v219 = vadd.f32 %v40, %v218
  %v220 = vpop.f32.mrb[0].mxu0
  %221 = vdwg.mxu0
  %v222 = vmax.f32 %v160, 0.0
  %v223 = vmax.f32 %v163, 0.0
  %v224 = vmax.f32 %v168, 0.0
  %v225 = vmax.f32 %v171, 0.0
  %v226 = vmax.f32 %v176, 0.0
  %v227 = vmax.f32 %v179, 0.0
  %v228 = vmax.f32 %v184, 0.0
  %v229 = vmax.f32 %v187, 0.0
  %v230 = vmax.f32 %v192, 0.0
  %v231 = vmax.f32 %v195, 0.0
  %v232 = vmax.f32 %v200, 0.0
  %v233 = vmax.f32 %v203, 0.0
  %v234 = vmax.f32 %v208, 0.0
  %v235 = vmax.f32 %v211, 0.0
  %v236 = vmax.f32 %v216, 0.0
  %v237 = vmax.f32 %v219, 0.0
  %vm238 = vcmask 261120
  %239 = vst.msk [vmem:[%s3] sm:$0xff] %vm238, %v222
  %240 = vst.msk [vmem:[%s3 + $0x8] sm:$0xff] %vm238, %v223
  %241 = vst.msk [vmem:[%s3 + $0x10] sm:$0xff] %vm238, %v224
  %242 = vst.msk [vmem:[%s3 + $0x18] sm:$0xff] %vm238, %v225
  %243 = vst.msk [vmem:[%s3 + $0x20] sm:$0xff] %vm238, %v226
  %244 = vst.msk [vmem:[%s3 + $0x28] sm:$0xff] %vm238, %v227
  %245 = vst.msk [vmem:[%s3 + $0x30] sm:$0xff] %vm238, %v228
  %246 = vst.msk [vmem:[%s3 + $0x38] sm:$0xff] %vm238, %v229
  %247 = vst.msk [vmem:[%s3 + $0x40] sm:$0xff] %vm238, %v230
  %248 = vst.msk [vmem:[%s3 + $0x48] sm:$0xff] %vm238, %v231
  %249 = vst.msk [vmem:[%s3 + $0x50] sm:$0xff] %vm238, %v232
  %250 = vst.msk [vmem:[%s3 + $0x58] sm:$0xff] %vm238, %v233
  %251 = vst.msk [vmem:[%s3 + $0x60] sm:$0xff] %vm238, %v234
  %252 = vst.msk [vmem:[%s3 + $0x68] sm:$0xff] %vm238, %v235
  %253 = vst.msk [vmem:[%s3 + $0x70] sm:$0xff] %vm238, %v236
  %254 = vst.msk [vmem:[%s3 + $0x78] sm:$0xff] %vm238, %v237
  // Predicated region
  $region14: #{discriminator_forward.5} parent=0 // pred_check
    _
  $region15: #{discriminator_forward.5} parent=0 // pred_check_branch
    %256 = sbr.rel (0) target = $region17
  $region16: #{discriminator_forward.5} parent=0 // pred_region
    _
  $region17: #{discriminator_forward.5} parent=0 // pred_fallthru
    _
  // Predicated region
  $region18: #{discriminator_forward.5} parent=0 // pred_check
    _
  $region19: #{discriminator_forward.5} parent=0 // pred_check_branch
    %258 = sbr.rel (0) target = $region21
  $region20: #{discriminator_forward.5} parent=0 // pred_region
    _
  $region21: #{discriminator_forward.5} parent=0 // pred_fallthru
    _

// kernel: discriminator_forward.6
$region0: #{discriminator_forward.6}
  #allocation0 [shape = 'u32[]', space=smem, size = 0x4, offset = 0x4, fixed_abs, tag = 'smem constant byte address 0x4 - core index']
  #allocation1 [shape = 'u32[144,128]{1,0:T(1,128)}', space=vmem, size = 0x12000, scoped, tag = 'internal scratch']
  %s0 = inlined_call_operand.vmem [shape: bf16[32,288], index: 0, kind: input, shape index: {}]
  %s1 = inlined_call_operand.vmem [shape: bf16[288,32], index: 1, kind: input, shape index: {}]
  %s2 = inlined_call_operand.vmem [shape: f32[1,32], index: 2, kind: input, shape index: {}]
  %s3 = inlined_call_operand.vmem [shape: f32[32,32], index: 3, kind: output, shape index: {}]
  %s4 = sld [smem:[#allocation0]]
  $region22: #{discriminator_forward.6} parent=0
    _
  %s6 = ssub.s32 1, %s4
  %s7 = scalar_select 0, %s6, %s4
  // Predicated region
  $region2: #{discriminator_forward.6} parent=0 // pred_check
    _
  $region3: #{discriminator_forward.6} parent=0 // pred_check_branch
    %9 = sbr.rel (0) target = $region5
  $region4: #{discriminator_forward.6} parent=0 // pred_region
    _
  $region5: #{discriminator_forward.6} parent=0 // pred_fallthru
    _
  // Predicated region
  $region6: #{discriminator_forward.6} parent=0 // pred_check
    _
  $region7: #{discriminator_forward.6} parent=0 // pred_check_branch
    %11 = sbr.rel (0) target = $region9
  $region8: #{discriminator_forward.6} parent=0 // pred_region
    _
  $region9: #{discriminator_forward.6} parent=0 // pred_fallthru
    _
  // Predicated region
  $region10: #{discriminator_forward.6} parent=0 // pred_check
    _
  $region11: #{discriminator_forward.6} parent=0 // pred_check_branch
    %13 = sbr.rel (0) target = $region13
  $region12: #{discriminator_forward.6} parent=0 // pred_region
    _
  $region13: #{discriminator_forward.6} parent=0 // pred_fallthru
    _
  %v15 = vld [vmem:[%s0] sm:$0xff]
  %v16 = vld [vmem:[%s0 + $0x8] sm:$0xf]
  %v17 = vld [vmem:[%s0 + $0xc] sm:$0xff]
  %v18 = vld [vmem:[%s0 + $0x14] sm:$0xf]
  %v19 = vld [vmem:[%s0 + $0x18] sm:$0xff]
  %v20 = vld [vmem:[%s0 + $0x20] sm:$0xf]
  %v21 = vld [vmem:[%s0 + $0x24] sm:$0xff]
  %v22 = vld [vmem:[%s0 + $0x2c] sm:$0xf]
  %v23 = vld [vmem:[%s1] sm:$0xf]
  %v24 = vld [vmem:[%s1 + $0x4] sm:$0xf]
  %v25 = vld [vmem:[%s1 + $0x8] sm:$0xf]
  %v26 = vld [vmem:[%s1 + $0xc] sm:$0xf]
  %v27 = vld [vmem:[%s1 + $0x10] sm:$0xf]
  %v28 = vld [vmem:[%s1 + $0x14] sm:$0xf]
  %v29 = vld [vmem:[%s1 + $0x18] sm:$0xf]
  %v30 = vld [vmem:[%s1 + $0x1c] sm:$0xf]
  %v31 = vld [vmem:[%s1 + $0x20] sm:$0xf]
  %v32 = vld [vmem:[%s1 + $0x24] sm:$0xf]
  %v33 = vld [vmem:[%s1 + $0x28] sm:$0xf]
  %v34 = vld [vmem:[%s1 + $0x2c] sm:$0xf]
  %v35 = vld [vmem:[%s1 + $0x30] sm:$0xf]
  %v36 = vld [vmem:[%s1 + $0x34] sm:$0xf]
  %v37 = vld [vmem:[%s1 + $0x38] sm:$0xf]
  %v38 = vld [vmem:[%s1 + $0x3c] sm:$0xf]
  %v39 = vld [vmem:[%s1 + $0x40] sm:$0xf]
  %v40 = vld [vmem:[%s1 + $0x44] sm:$0xf]
  %v41 = vld [vmem:[%s1 + $0x48] sm:$0xf]
  %v42 = vld [vmem:[%s1 + $0x4c] sm:$0xf]
  %v43 = vld [vmem:[%s1 + $0x50] sm:$0xf]
  %v44 = vld [vmem:[%s1 + $0x54] sm:$0xf]
  %v45 = vld [vmem:[%s1 + $0x58] sm:$0xf]
  %v46 = vld [vmem:[%s1 + $0x5c] sm:$0xf]
  %v47 = vld [vmem:[%s1 + $0x60] sm:$0xf]
  %v48 = vld [vmem:[%s1 + $0x64] sm:$0xf]
  %v49 = vld [vmem:[%s1 + $0x68] sm:$0xf]
  %v50 = vld [vmem:[%s1 + $0x6c] sm:$0xf]
  %v51 = vld [vmem:[%s1 + $0x70] sm:$0xf]
  %v52 = vld [vmem:[%s1 + $0x74] sm:$0xf]
  %v53 = vld [vmem:[%s1 + $0x78] sm:$0xf]
  %v54 = vld [vmem:[%s1 + $0x7c] sm:$0xf]
  %v55 = vld [vmem:[%s1 + $0x80] sm:$0xf]
  %v56 = vld [vmem:[%s1 + $0x84] sm:$0xf]
  %v57 = vld [vmem:[%s1 + $0x88] sm:$0xf]
  %v58 = vld [vmem:[%s1 + $0x8c] sm:$0xf]
  %v59 = vld [vmem:[%s2] sm:$0x1]
  %v61 = vlaneseq
  %v62 = vshrl.u32 %v61, 7
  %v63 = vsub.s32 0, %v62
  %v64 = vrot.slane %v59, %v63
  %v74 = vunpack.c.l.b16 %v15
  %v75 = vunpack.c.h.b16 %v15
  %v76 = vunpack.c.l.b16 %v16
  %v77 = vunpack.c.l.b16 %v17
  %v78 = vunpack.c.h.b16 %v17
  %v79 = vunpack.c.l.b16 %v18
  %v80 = vunpack.c.l.b16 %v19
  %v81 = vunpack.c.h.b16 %v19
  %v82 = vunpack.c.l.b16 %v20
  %v83 = vunpack.c.l.b16 %v21
  %v84 = vunpack.c.h.b16 %v21
  %v85 = vunpack.c.l.b16 %v22
  %v86 = vpack.c.b16 %v77, %v74
  %v87 = vpack.c.b16 %v78, %v75
  %v88 = vpack.c.b16 %v79, %v76
  %v89 = vpack.c.b16 %v83, %v80
  %v90 = vpack.c.b16 %v84, %v81
  %v91 = vpack.c.b16 %v85, %v82
  %v132 = vunpack.c.l.b16 %v23
  %v133 = vunpack.c.l.b16 %v24
  %v134 = vunpack.c.l.b16 %v25
  %v135 = vunpack.c.l.b16 %v26
  %v136 = vunpack.c.l.b16 %v27
  %v137 = vunpack.c.l.b16 %v28
  %v138 = vunpack.c.l.b16 %v29
  %v139 = vunpack.c.l.b16 %v30
  %v140 = vunpack.c.l.b16 %v31
  %v141 = vunpack.c.l.b16 %v32
  %v142 = vunpack.c.l.b16 %v33
  %v143 = vunpack.c.l.b16 %v34
  %v144 = vunpack.c.l.b16 %v35
  %v145 = vunpack.c.l.b16 %v36
  %v146 = vunpack.c.l.b16 %v37
  %v147 = vunpack.c.l.b16 %v38
  %v148 = vunpack.c.l.b16 %v39
  %v149 = vunpack.c.l.b16 %v40
  %v150 = vunpack.c.l.b16 %v41
  %v151 = vunpack.c.l.b16 %v42
  %v152 = vunpack.c.l.b16 %v43
  %v153 = vunpack.c.l.b16 %v44
  %v154 = vunpack.c.l.b16 %v45
  %v155 = vunpack.c.l.b16 %v46
  %v156 = vunpack.c.l.b16 %v47
  %v157 = vunpack.c.l.b16 %v48
  %v158 = vunpack.c.l.b16 %v49
  %v159 = vunpack.c.l.b16 %v50
  %v160 = vunpack.c.l.b16 %v51
  %v161 = vunpack.c.l.b16 %v52
  %v162 = vunpack.c.l.b16 %v53
  %v163 = vunpack.c.l.b16 %v54
  %v164 = vunpack.c.l.b16 %v55
  %v165 = vunpack.c.l.b16 %v56
  %v166 = vunpack.c.l.b16 %v57
  %v167 = vunpack.c.l.b16 %v58
  %v168 = vpack.c.b16 %v133, %v132
  %v169 = vpack.c.b16 %v135, %v134
  %v170 = vpack.c.b16 %v137, %v136
  %v171 = vpack.c.b16 %v139, %v138
  %v172 = vpack.c.b16 %v141, %v140
  %v173 = vpack.c.b16 %v143, %v142
  %v174 = vpack.c.b16 %v145, %v144
  %v175 = vpack.c.b16 %v147, %v146
  %v176 = vpack.c.b16 %v149, %v148
  %v177 = vpack.c.b16 %v151, %v150
  %v178 = vpack.c.b16 %v153, %v152
  %v179 = vpack.c.b16 %v155, %v154
  %v180 = vpack.c.b16 %v157, %v156
  %v181 = vpack.c.b16 %v159, %v158
  %v182 = vpack.c.b16 %v161, %v160
  %v183 = vpack.c.b16 %v163, %v162
  %v184 = vpack.c.b16 %v165, %v164
  %v185 = vpack.c.b16 %v167, %v166
  %vm204 = vcmask 261120
  %v206 = vsel %vm204, %v88, 0
  %v209 = vsel %vm204, %v91, 0
  %211 = vmatprep.subr.bf16.mxu0 0
  %212 = vmatpush1.bf16.msra.mxu0 %v168
  %213 = vmatprep.subr.bf16.mxu0 0
  %214 = vmatpush1.bf16.msra.mxu0 %v169
  %215 = vmatprep.subr.bf16.mxu0 0
  %216 = vmatpush1.bf16.msra.mxu0 %v170
  %217 = vmatprep.subr.bf16.mxu0 0
  %218 = vmatpush1.bf16.msra.mxu0 %v171
  %219 = vmatprep.subr.bf16.mxu0 0
  %220 = vmatpush1.bf16.msra.mxu0 %v172
  %221 = vmatprep.subr.bf16.mxu0 0
  %222 = vmatpush1.bf16.msra.mxu0 %v173
  %223 = vmatprep.subr.bf16.mxu0 0
  %224 = vmatpush1.bf16.msra.mxu0 %v174
  %225 = vmatprep.subr.bf16.mxu0 0
  %226 = vmatpush1.bf16.msra.mxu0 %v175
  %227 = vmatprep.subr.bf16.mxu0 0
  %228 = vmatpush1.bf16.msra.mxu0 %v176
  %229 = vmatprep.subr.bf16.mxu0 0
  %230 = vmatpush1.bf16.msra.mxu0 %v177
  %231 = vmatprep.subr.bf16.mxu0 0
  %232 = vmatpush1.bf16.msra.mxu0 %v178
  %233 = vmatprep.subr.bf16.mxu0 0
  %234 = vmatpush1.bf16.msra.mxu0 %v179
  %235 = vmatprep.subr.bf16.mxu0 0
  %236 = vmatpush1.bf16.msra.mxu0 %v180
  %237 = vmatprep.subr.bf16.mxu0 0
  %238 = vmatpush1.bf16.msra.mxu0 %v181
  %239 = vmatprep.subr.bf16.mxu0 0
  %240 = vmatpush1.bf16.msra.mxu0 %v182
  %241 = vmatprep.subr.bf16.mxu0 0
  %242 = vmatpush1.bf16.msra.mxu0 %v183
  %243 = vmatprep.mubr.bf16.mxu0 %v87
  %244 = vmatmul.mubr.bf16.gmra.mrb[0].mxu0 %v86
  %v245 = vpop.f32.mrb[0].mxu0
  %v246 = vadd.f32 %v64, %v245
  %v247 = vpop.f32.mrb[0].mxu0
  %v248 = vpop.f32.mrb[0].mxu0
  %v249 = vadd.f32 %v64, %v248
  %v250 = vpop.f32.mrb[0].mxu0
  %251 = vmatprep.mubr.bf16.mxu0 %v90
  %252 = vmatmul.mubr.bf16.gmra.mrb[0].mxu0 %v89
  %v253 = vpop.f32.mrb[0].mxu0
  %v254 = vadd.f32 %v64, %v253
  %v255 = vpop.f32.mrb[0].mxu0
  %v256 = vpop.f32.mrb[0].mxu0
  %v257 = vadd.f32 %v64, %v256
  %v258 = vpop.f32.mrb[0].mxu0
  %259 = vdwg.mxu0
  %260 = vmatprep.subr.bf16.mxu0 0
  %261 = vmatpush1.bf16.msra.mxu0 %v184
  %262 = vmatprep.subr.bf16.mxu0 0
  %263 = vmatpush1.bf16.msra.mxu0 %v185
  %264 = vmatprep.subr.bf16.mxu0 0
  %265 = vmatpush1.bf16.msra.mxu0 0
  %266 = vmatprep.subr.bf16.mxu0 0
  %267 = vmatpush1.bf16.msra.mxu0 0
  %268 = vmatprep.subr.bf16.mxu0 0
  %269 = vmatpush1.bf16.msra.mxu0 0
  %270 = vmatprep.subr.bf16.mxu0 0
  %271 = vmatpush1.bf16.msra.mxu0 0
  %272 = vmatprep.subr.bf16.mxu0 0
  %273 = vmatpush1.bf16.msra.mxu0 0
  %274 = vmatprep.subr.bf16.mxu0 0
  %275 = vmatpush1.bf16.msra.mxu0 0
  %276 = vmatprep.subr.bf16.mxu0 0
  %277 = vmatpush1.bf16.msra.mxu0 0
  %278 = vmatprep.subr.bf16.mxu0 0
  %279 = vmatpush1.bf16.msra.mxu0 0
  %280 = vmatprep.subr.bf16.mxu0 0
  %281 = vmatpush1.bf16.msra.mxu0 0
  %282 = vmatprep.subr.bf16.mxu0 0
  %283 = vmatpush1.bf16.msra.mxu0 0
  %284 = vmatprep.subr.bf16.mxu0 0
  %285 = vmatpush1.bf16.msra.mxu0 0
  %286 = vmatprep.subr.bf16.mxu0 0
  %287 = vmatpush1.bf16.msra.mxu0 0
  %288 = vmatprep.subr.bf16.mxu0 0
  %289 = vmatpush1.bf16.msra.mxu0 0
  %290 = vmatprep.subr.bf16.mxu0 0
  %291 = vmatpush1.bf16.msra.mxu0 0
  %292 = vmatprep.mubr.bf16.mxu0 0
  %293 = vmatmul.mubr.bf16.gmra.mrb[0].mxu0 %v206
  %v294 = vpop.f32.mrb[0].mxu0
  %v295 = vadd.f32 %v246, %v294
  %v296 = vpop.f32.mrb[0].mxu0
  %v297 = vpop.f32.mrb[0].mxu0
  %v298 = vadd.f32 %v249, %v297
  %v299 = vpop.f32.mrb[0].mxu0
  %300 = vmatprep.mubr.bf16.mxu0 0
  %301 = vmatmul.mubr.bf16.gmra.mrb[0].mxu0 %v209
  %v302 = vpop.f32.mrb[0].mxu0
  %v303 = vadd.f32 %v254, %v302
  %v304 = vpop.f32.mrb[0].mxu0
  %v305 = vpop.f32.mrb[0].mxu0
  %v306 = vadd.f32 %v257, %v305
  %v307 = vpop.f32.mrb[0].mxu0
  %308 = vdwg.mxu0
  %v309 = vmax.f32 %v295, 0.0
  %v310 = vmax.f32 %v298, 0.0
  %v311 = vmax.f32 %v303, 0.0
  %v312 = vmax.f32 %v306, 0.0
  %313 = vst.msk [vmem:[%s3] sm:$0xff] %vm204, %v309
  %314 = vst.msk [vmem:[%s3 + $0x8] sm:$0xff] %vm204, %v310
  %315 = vst.msk [vmem:[%s3 + $0x10] sm:$0xff] %vm204, %v311
  %316 = vst.msk [vmem:[%s3 + $0x18] sm:$0xff] %vm204, %v312
  // Predicated region
  $region14: #{discriminator_forward.6} parent=0 // pred_check
    _
  $region15: #{discriminator_forward.6} parent=0 // pred_check_branch
    %318 = sbr.rel (0) target = $region17
  $region16: #{discriminator_forward.6} parent=0 // pred_region
    _
  $region17: #{discriminator_forward.6} parent=0 // pred_fallthru
    _
  // Predicated region
  $region18: #{discriminator_forward.6} parent=0 // pred_check
    _
  $region19: #{discriminator_forward.6} parent=0 // pred_check_branch
    %320 = sbr.rel (0) target = $region21
  $region20: #{discriminator_forward.6} parent=0 // pred_region
    _
  $region21: #{discriminator_forward.6} parent=0 // pred_fallthru
    _

// kernel: discriminator_forward.7
$region0: #{discriminator_forward.7}
  #allocation0 [shape = 'u32[]', space=smem, size = 0x4, offset = 0x4, fixed_abs, tag = 'smem constant byte address 0x4 - core index']
  #allocation1 [shape = 'u32[144,128]{1,0:T(1,128)}', space=vmem, size = 0x12000, scoped, tag = 'internal scratch']
  %s0 = inlined_call_operand.vmem [shape: bf16[32,288], index: 0, kind: input, shape index: {}]
  %s1 = inlined_call_operand.vmem [shape: bf16[288,32], index: 1, kind: input, shape index: {}]
  %s2 = inlined_call_operand.vmem [shape: f32[1,32], index: 2, kind: input, shape index: {}]
  %s3 = inlined_call_operand.vmem [shape: f32[32,32], index: 3, kind: output, shape index: {}]
  %s4 = sld [smem:[#allocation0]]
  $region22: #{discriminator_forward.7} parent=0
    _
  %s6 = ssub.s32 1, %s4
  %s7 = scalar_select 0, %s6, %s4
  // Predicated region
  $region2: #{discriminator_forward.7} parent=0 // pred_check
    _
  $region3: #{discriminator_forward.7} parent=0 // pred_check_branch
    %9 = sbr.rel (0) target = $region5
  $region4: #{discriminator_forward.7} parent=0 // pred_region
    _
  $region5: #{discriminator_forward.7} parent=0 // pred_fallthru
    _
  // Predicated region
  $region6: #{discriminator_forward.7} parent=0 // pred_check
    _
  $region7: #{discriminator_forward.7} parent=0 // pred_check_branch
    %11 = sbr.rel (0) target = $region9
  $region8: #{discriminator_forward.7} parent=0 // pred_region
    _
  $region9: #{discriminator_forward.7} parent=0 // pred_fallthru
    _
  // Predicated region
  $region10: #{discriminator_forward.7} parent=0 // pred_check
    _
  $region11: #{discriminator_forward.7} parent=0 // pred_check_branch
    %13 = sbr.rel (0) target = $region13
  $region12: #{discriminator_forward.7} parent=0 // pred_region
    _
  $region13: #{discriminator_forward.7} parent=0 // pred_fallthru
    _
  %v15 = vld [vmem:[%s0] sm:$0xff]
  %v16 = vld [vmem:[%s0 + $0x8] sm:$0xf]
  %v17 = vld [vmem:[%s0 + $0xc] sm:$0xff]
  %v18 = vld [vmem:[%s0 + $0x14] sm:$0xf]
  %v19 = vld [vmem:[%s0 + $0x18] sm:$0xff]
  %v20 = vld [vmem:[%s0 + $0x20] sm:$0xf]
  %v21 = vld [vmem:[%s0 + $0x24] sm:$0xff]
  %v22 = vld [vmem:[%s0 + $0x2c] sm:$0xf]
  %v23 = vmax.bf16 %v15, 0
  %v24 = vmax.bf16 %v16, 0
  %v25 = vmax.bf16 %v17, 0
  %v26 = vmax.bf16 %v18, 0
  %v27 = vmax.bf16 %v19, 0
  %v28 = vmax.bf16 %v20, 0
  %v29 = vmax.bf16 %v21, 0
  %v30 = vmax.bf16 %v22, 0
  %v31 = vld [vmem:[%s1] sm:$0xf]
  %v32 = vld [vmem:[%s1 + $0x4] sm:$0xf]
  %v33 = vld [vmem:[%s1 + $0x8] sm:$0xf]
  %v34 = vld [vmem:[%s1 + $0xc] sm:$0xf]
  %v35 = vld [vmem:[%s1 + $0x10] sm:$0xf]
  %v36 = vld [vmem:[%s1 + $0x14] sm:$0xf]
  %v37 = vld [vmem:[%s1 + $0x18] sm:$0xf]
  %v38 = vld [vmem:[%s1 + $0x1c] sm:$0xf]
  %v39 = vld [vmem:[%s1 + $0x20] sm:$0xf]
  %v40 = vld [vmem:[%s1 + $0x24] sm:$0xf]
  %v41 = vld [vmem:[%s1 + $0x28] sm:$0xf]
  %v42 = vld [vmem:[%s1 + $0x2c] sm:$0xf]
  %v43 = vld [vmem:[%s1 + $0x30] sm:$0xf]
  %v44 = vld [vmem:[%s1 + $0x34] sm:$0xf]
  %v45 = vld [vmem:[%s1 + $0x38] sm:$0xf]
  %v46 = vld [vmem:[%s1 + $0x3c] sm:$0xf]
  %v47 = vld [vmem:[%s1 + $0x40] sm:$0xf]
  %v48 = vld [vmem:[%s1 + $0x44] sm:$0xf]
  %v49 = vld [vmem:[%s1 + $0x48] sm:$0xf]
  %v50 = vld [vmem:[%s1 + $0x4c] sm:$0xf]
  %v51 = vld [vmem:[%s1 + $0x50] sm:$0xf]
  %v52 = vld [vmem:[%s1 + $0x54] sm:$0xf]
  %v53 = vld [vmem:[%s1 + $0x58] sm:$0xf]
  %v54 = vld [vmem:[%s1 + $0x5c] sm:$0xf]
  %v55 = vld [vmem:[%s1 + $0x60] sm:$0xf]
  %v56 = vld [vmem:[%s1 + $0x64] sm:$0xf]
  %v57 = vld [vmem:[%s1 + $0x68] sm:$0xf]
  %v58 = vld [vmem:[%s1 + $0x6c] sm:$0xf]
  %v59 = vld [vmem:[%s1 + $0x70] sm:$0xf]
  %v60 = vld [vmem:[%s1 + $0x74] sm:$0xf]
  %v61 = vld [vmem:[%s1 + $0x78] sm:$0xf]
  %v62 = vld [vmem:[%s1 + $0x7c] sm:$0xf]
  %v63 = vld [vmem:[%s1 + $0x80] sm:$0xf]
  %v64 = vld [vmem:[%s1 + $0x84] sm:$0xf]
  %v65 = vld [vmem:[%s1 + $0x88] sm:$0xf]
  %v66 = vld [vmem:[%s1 + $0x8c] sm:$0xf]
  %v67 = vld [vmem:[%s2] sm:$0x1]
  %v69 = vlaneseq
  %v70 = vshrl.u32 %v69, 7
  %v71 = vsub.s32 0, %v70
  %v72 = vrot.slane %v67, %v71
  %v82 = vunpack.c.l.b16 %v23
  %v83 = vunpack.c.h.b16 %v23
  %v84 = vunpack.c.l.b16 %v24
  %v85 = vunpack.c.l.b16 %v25
  %v86 = vunpack.c.h.b16 %v25
  %v87 = vunpack.c.l.b16 %v26
  %v88 = vunpack.c.l.b16 %v27
  %v89 = vunpack.c.h.b16 %v27
  %v90 = vunpack.c.l.b16 %v28
  %v91 = vunpack.c.l.b16 %v29
  %v92 = vunpack.c.h.b16 %v29
  %v93 = vunpack.c.l.b16 %v30
  %v94 = vpack.c.b16 %v85, %v82
  %v95 = vpack.c.b16 %v86, %v83
  %v96 = vpack.c.b16 %v87, %v84
  %v97 = vpack.c.b16 %v91, %v88
  %v98 = vpack.c.b16 %v92, %v89
  %v99 = vpack.c.b16 %v93, %v90
  %v140 = vunpack.c.l.b16 %v31
  %v141 = vunpack.c.l.b16 %v32
  %v142 = vunpack.c.l.b16 %v33
  %v143 = vunpack.c.l.b16 %v34
  %v144 = vunpack.c.l.b16 %v35
  %v145 = vunpack.c.l.b16 %v36
  %v146 = vunpack.c.l.b16 %v37
  %v147 = vunpack.c.l.b16 %v38
  %v148 = vunpack.c.l.b16 %v39
  %v149 = vunpack.c.l.b16 %v40
  %v150 = vunpack.c.l.b16 %v41
  %v151 = vunpack.c.l.b16 %v42
  %v152 = vunpack.c.l.b16 %v43
  %v153 = vunpack.c.l.b16 %v44
  %v154 = vunpack.c.l.b16 %v45
  %v155 = vunpack.c.l.b16 %v46
  %v156 = vunpack.c.l.b16 %v47
  %v157 = vunpack.c.l.b16 %v48
  %v158 = vunpack.c.l.b16 %v49
  %v159 = vunpack.c.l.b16 %v50
  %v160 = vunpack.c.l.b16 %v51
  %v161 = vunpack.c.l.b16 %v52
  %v162 = vunpack.c.l.b16 %v53
  %v163 = vunpack.c.l.b16 %v54
  %v164 = vunpack.c.l.b16 %v55
  %v165 = vunpack.c.l.b16 %v56
  %v166 = vunpack.c.l.b16 %v57
  %v167 = vunpack.c.l.b16 %v58
  %v168 = vunpack.c.l.b16 %v59
  %v169 = vunpack.c.l.b16 %v60
  %v170 = vunpack.c.l.b16 %v61
  %v171 = vunpack.c.l.b16 %v62
  %v172 = vunpack.c.l.b16 %v63
  %v173 = vunpack.c.l.b16 %v64
  %v174 = vunpack.c.l.b16 %v65
  %v175 = vunpack.c.l.b16 %v66
  %v176 = vpack.c.b16 %v141, %v140
  %v177 = vpack.c.b16 %v143, %v142
  %v178 = vpack.c.b16 %v145, %v144
  %v179 = vpack.c.b16 %v147, %v146
  %v180 = vpack.c.b16 %v149, %v148
  %v181 = vpack.c.b16 %v151, %v150
  %v182 = vpack.c.b16 %v153, %v152
  %v183 = vpack.c.b16 %v155, %v154
  %v184 = vpack.c.b16 %v157, %v156
  %v185 = vpack.c.b16 %v159, %v158
  %v186 = vpack.c.b16 %v161, %v160
  %v187 = vpack.c.b16 %v163, %v162
  %v188 = vpack.c.b16 %v165, %v164
  %v189 = vpack.c.b16 %v167, %v166
  %v190 = vpack.c.b16 %v169, %v168
  %v191 = vpack.c.b16 %v171, %v170
  %v192 = vpack.c.b16 %v173, %v172
  %v193 = vpack.c.b16 %v175, %v174
  %vm212 = vcmask 261120
  %v214 = vsel %vm212, %v96, 0
  %v217 = vsel %vm212, %v99, 0
  %219 = vmatprep.subr.bf16.mxu0 0
  %220 = vmatpush1.bf16.msra.mxu0 %v176
  %221 = vmatprep.subr.bf16.mxu0 0
  %222 = vmatpush1.bf16.msra.mxu0 %v177
  %223 = vmatprep.subr.bf16.mxu0 0
  %224 = vmatpush1.bf16.msra.mxu0 %v178
  %225 = vmatprep.subr.bf16.mxu0 0
  %226 = vmatpush1.bf16.msra.mxu0 %v179
  %227 = vmatprep.subr.bf16.mxu0 0
  %228 = vmatpush1.bf16.msra.mxu0 %v180
  %229 = vmatprep.subr.bf16.mxu0 0
  %230 = vmatpush1.bf16.msra.mxu0 %v181
  %231 = vmatprep.subr.bf16.mxu0 0
  %232 = vmatpush1.bf16.msra.mxu0 %v182
  %233 = vmatprep.subr.bf16.mxu0 0
  %234 = vmatpush1.bf16.msra.mxu0 %v183
  %235 = vmatprep.subr.bf16.mxu0 0
  %236 = vmatpush1.bf16.msra.mxu0 %v184
  %237 = vmatprep.subr.bf16.mxu0 0
  %238 = vmatpush1.bf16.msra.mxu0 %v185
  %239 = vmatprep.subr.bf16.mxu0 0
  %240 = vmatpush1.bf16.msra.mxu0 %v186
  %241 = vmatprep.subr.bf16.mxu0 0
  %242 = vmatpush1.bf16.msra.mxu0 %v187
  %243 = vmatprep.subr.bf16.mxu0 0
  %244 = vmatpush1.bf16.msra.mxu0 %v188
  %245 = vmatprep.subr.bf16.mxu0 0
  %246 = vmatpush1.bf16.msra.mxu0 %v189
  %247 = vmatprep.subr.bf16.mxu0 0
  %248 = vmatpush1.bf16.msra.mxu0 %v190
  %249 = vmatprep.subr.bf16.mxu0 0
  %250 = vmatpush1.bf16.msra.mxu0 %v191
  %251 = vmatprep.mubr.bf16.mxu0 %v95
  %252 = vmatmul.mubr.bf16.gmra.mrb[0].mxu0 %v94
  %v253 = vpop.f32.mrb[0].mxu0
  %v254 = vadd.f32 %v72, %v253
  %v255 = vpop.f32.mrb[0].mxu0
  %v256 = vpop.f32.mrb[0].mxu0
  %v257 = vadd.f32 %v72, %v256
  %v258 = vpop.f32.mrb[0].mxu0
  %259 = vmatprep.mubr.bf16.mxu0 %v98
  %260 = vmatmul.mubr.bf16.gmra.mrb[0].mxu0 %v97
  %v261 = vpop.f32.mrb[0].mxu0
  %v262 = vadd.f32 %v72, %v261
  %v263 = vpop.f32.mrb[0].mxu0
  %v264 = vpop.f32.mrb[0].mxu0
  %v265 = vadd.f32 %v72, %v264
  %v266 = vpop.f32.mrb[0].mxu0
  %267 = vdwg.mxu0
  %268 = vmatprep.subr.bf16.mxu0 0
  %269 = vmatpush1.bf16.msra.mxu0 %v192
  %270 = vmatprep.subr.bf16.mxu0 0
  %271 = vmatpush1.bf16.msra.mxu0 %v193
  %272 = vmatprep.subr.bf16.mxu0 0
  %273 = vmatpush1.bf16.msra.mxu0 0
  %274 = vmatprep.subr.bf16.mxu0 0
  %275 = vmatpush1.bf16.msra.mxu0 0
  %276 = vmatprep.subr.bf16.mxu0 0
  %277 = vmatpush1.bf16.msra.mxu0 0
  %278 = vmatprep.subr.bf16.mxu0 0
  %279 = vmatpush1.bf16.msra.mxu0 0
  %280 = vmatprep.subr.bf16.mxu0 0
  %281 = vmatpush1.bf16.msra.mxu0 0
  %282 = vmatprep.subr.bf16.mxu0 0
  %283 = vmatpush1.bf16.msra.mxu0 0
  %284 = vmatprep.subr.bf16.mxu0 0
  %285 = vmatpush1.bf16.msra.mxu0 0
  %286 = vmatprep.subr.bf16.mxu0 0
  %287 = vmatpush1.bf16.msra.mxu0 0
  %288 = vmatprep.subr.bf16.mxu0 0
  %289 = vmatpush1.bf16.msra.mxu0 0
  %290 = vmatprep.subr.bf16.mxu0 0
  %291 = vmatpush1.bf16.msra.mxu0 0
  %292 = vmatprep.subr.bf16.mxu0 0
  %293 = vmatpush1.bf16.msra.mxu0 0
  %294 = vmatprep.subr.bf16.mxu0 0
  %295 = vmatpush1.bf16.msra.mxu0 0
  %296 = vmatprep.subr.bf16.mxu0 0
  %297 = vmatpush1.bf16.msra.mxu0 0
  %298 = vmatprep.subr.bf16.mxu0 0
  %299 = vmatpush1.bf16.msra.mxu0 0
  %300 = vmatprep.mubr.bf16.mxu0 0
  %301 = vmatmul.mubr.bf16.gmra.mrb[0].mxu0 %v214
  %v302 = vpop.f32.mrb[0].mxu0
  %v303 = vadd.f32 %v254, %v302
  %v304 = vpop.f32.mrb[0].mxu0
  %v305 = vpop.f32.mrb[0].mxu0
  %v306 = vadd.f32 %v257, %v305
  %v307 = vpop.f32.mrb[0].mxu0
  %308 = vmatprep.mubr.bf16.mxu0 0
  %309 = vmatmul.mubr.bf16.gmra.mrb[0].mxu0 %v217
  %v310 = vpop.f32.mrb[0].mxu0
  %v311 = vadd.f32 %v262, %v310
  %v312 = vpop.f32.mrb[0].mxu0
  %v313 = vpop.f32.mrb[0].mxu0
  %v314 = vadd.f32 %v265, %v313
  %v315 = vpop.f32.mrb[0].mxu0
  %316 = vdwg.mxu0
  %v321 = vrot.slane %v15, 4
  %v322 = vrot.slane %v17, 4
  %v323 = vrot.slane %v19, 4
  %v324 = vrot.slane %v21, 4
  %v329 = vunpack.c.l.bf16 %v321
  %v330 = vunpack.c.l.bf16 %v322
  %v331 = vunpack.c.l.bf16 %v323
  %v332 = vunpack.c.l.bf16 %v324
  %v333 = vmul.f32 %v303, 0.5
  %v334 = vmul.f32 %v306, 0.5
  %v335 = vmul.f32 %v311, 0.5
  %v336 = vmul.f32 %v314, 0.5
  %v337 = vadd.f32 %v329, %v333
  %v338 = vadd.f32 %v330, %v334
  %v339 = vadd.f32 %v331, %v335
  %v340 = vadd.f32 %v332, %v336
  %341 = vst.msk [vmem:[%s3] sm:$0xff] %vm212, %v337
  %342 = vst.msk [vmem:[%s3 + $0x8] sm:$0xff] %vm212, %v338
  %343 = vst.msk [vmem:[%s3 + $0x10] sm:$0xff] %vm212, %v339
  %344 = vst.msk [vmem:[%s3 + $0x18] sm:$0xff] %vm212, %v340
  // Predicated region
  $region14: #{discriminator_forward.7} parent=0 // pred_check
    _
  $region15: #{discriminator_forward.7} parent=0 // pred_check_branch
    %346 = sbr.rel (0) target = $region17
  $region16: #{discriminator_forward.7} parent=0 // pred_region
    _
  $region17: #{discriminator_forward.7} parent=0 // pred_fallthru
    _
  // Predicated region
  $region18: #{discriminator_forward.7} parent=0 // pred_check
    _
  $region19: #{discriminator_forward.7} parent=0 // pred_check_branch
    %348 = sbr.rel (0) target = $region21
  $region20: #{discriminator_forward.7} parent=0 // pred_region
    _
  $region21: #{discriminator_forward.7} parent=0 // pred_fallthru
    _

// kernel: discriminator_forward.9
$region0: #{discriminator_forward.9}
  #allocation0 [shape = 'u32[]', space=smem, size = 0x4, offset = 0x4, fixed_abs, tag = 'smem constant byte address 0x4 - core index']
  #allocation1 [shape = 'u32[144,128]{1,0:T(1,128)}', space=vmem, size = 0x12000, scoped, tag = 'internal scratch']
  #allocation2 [shape = 'f32[1,1]{1,0:T(1,128)S(1)}', space=vmem, size = 0x200, scoped, tag = 'scoped memory for discriminator_forward.9']
  %s0 = inlined_call_operand.vmem [shape: bf16[32,288], index: 0, kind: input, shape index: {}]
  %s1 = inlined_call_operand.vmem [shape: f32[1,288], index: 1, kind: input, shape index: {}]
  %s2 = inlined_call_operand.<no memory space> [shape: f32[1,1], index: 2, kind: input, shape index: {}]
  %s3 = inlined_call_operand.vmem [shape: f32[32,1], index: 3, kind: output, shape index: {}]
  %s4 = sld [smem:[#allocation0]]
  $region22: #{discriminator_forward.9} parent=0
    _
  %s6 = ssub.s32 1, %s4
  %s7 = scalar_select 0, %s6, %s4
  %v8 = vstv %s2
  %9 = vst [vmem:[#allocation2] sm:$0x1] %v8
  // Predicated region
  $region2: #{discriminator_forward.9} parent=0 // pred_check
    _
  $region3: #{discriminator_forward.9} parent=0 // pred_check_branch
    %11 = sbr.rel (0) target = $region5
  $region4: #{discriminator_forward.9} parent=0 // pred_region
    _
  $region5: #{discriminator_forward.9} parent=0 // pred_fallthru
    _
  // Predicated region
  $region6: #{discriminator_forward.9} parent=0 // pred_check
    _
  $region7: #{discriminator_forward.9} parent=0 // pred_check_branch
    %13 = sbr.rel (0) target = $region9
  $region8: #{discriminator_forward.9} parent=0 // pred_region
    _
  $region9: #{discriminator_forward.9} parent=0 // pred_fallthru
    _
  // Predicated region
  $region10: #{discriminator_forward.9} parent=0 // pred_check
    _
  $region11: #{discriminator_forward.9} parent=0 // pred_check_branch
    %15 = sbr.rel (0) target = $region13
  $region12: #{discriminator_forward.9} parent=0 // pred_region
    _
  $region13: #{discriminator_forward.9} parent=0 // pred_fallthru
    _
  %v16 = vld [vmem:[%s0] sm:$0xff]
  %v17 = vld [vmem:[%s0 + $0x8] sm:$0xf]
  %v18 = vld [vmem:[%s0 + $0xc] sm:$0xff]
  %v19 = vld [vmem:[%s0 + $0x14] sm:$0xf]
  %v20 = vld [vmem:[%s0 + $0x18] sm:$0xff]
  %v21 = vld [vmem:[%s0 + $0x20] sm:$0xf]
  %v22 = vld [vmem:[%s0 + $0x24] sm:$0xff]
  %v23 = vld [vmem:[%s0 + $0x2c] sm:$0xf]
  %v24 = vunpack.c.l.bf16 %v16
  %v25 = vunpack.c.h.bf16 %v16
  %v26 = vunpack.c.l.bf16 %v17
  %v27 = vunpack.c.l.bf16 %v18
  %v28 = vunpack.c.h.bf16 %v18
  %v29 = vunpack.c.l.bf16 %v19
  %v30 = vunpack.c.l.bf16 %v20
  %v31 = vunpack.c.h.bf16 %v20
  %v32 = vunpack.c.l.bf16 %v21
  %v33 = vunpack.c.l.bf16 %v22
  %v34 = vunpack.c.h.bf16 %v22
  %v35 = vunpack.c.l.bf16 %v23
  %v36 = vld [vmem:[%s1] sm:$0x7]
  %v38 = vlaneseq
  %v39 = vshrl.u32 %v38, 7
  %v40 = vsub.s32 0, %v39
  %v41 = vrot.slane %v36, %v40
  %v42 = vlaneseq
  %v43 = vshrl.u32 %v42, 7
  %v44 = vsub.s32 1, %v43
  %v45 = vrot.slane %v36, %v44
  %v46 = vlaneseq
  %v47 = vshrl.u32 %v46, 7
  %v48 = vsub.s32 2, %v47
  %v49 = vrot.slane %v36, %v48
  %v53 = vmul.f32 %v24, %v41
  %v54 = vmul.f32 %v25, %v45
  %v55 = vmul.f32 %v26, %v49
  %v56 = vmul.f32 %v27, %v41
  %v57 = vmul.f32 %v28, %v45
  %v58 = vmul.f32 %v29, %v49
  %v59 = vmul.f32 %v30, %v41
  %v60 = vmul.f32 %v31, %v45
  %v61 = vmul.f32 %v32, %v49
  %v62 = vmul.f32 %v33, %v41
  %v63 = vmul.f32 %v34, %v45
  %v64 = vmul.f32 %v35, %v49
  %v65 = vadd.f32 %v53, %v54
  %vm66 = vcmask 261120
  %v67 = vsel %vm66, %v55, 0.0
  %v68 = vadd.f32 %v65, %v67
  %69 = vadd.xlane.f32.xlu0 %v68
  %v70 = vpop.xlane.xlu0 %69
  %v71 = vadd.f32 %v56, %v57
  %v72 = vsel %vm66, %v58, 0.0
  %v73 = vadd.f32 %v71, %v72
  %74 = vadd.xlane.f32.xlu0 %v73
  %v75 = vpop.xlane.xlu0 %74
  %v76 = vadd.f32 %v59, %v60
  %v77 = vsel %vm66, %v61, 0.0
  %v78 = vadd.f32 %v76, %v77
  %79 = vadd.xlane.f32.xlu0 %v78
  %v80 = vpop.xlane.xlu0 %79
  %v81 = vadd.f32 %v62, %v63
  %v82 = vsel %vm66, %v64, 0.0
  %v83 = vadd.f32 %v81, %v82
  %84 = vadd.xlane.f32.xlu0 %v83
  %v85 = vpop.xlane.xlu0 %84
  %v86 = vld [vmem:[#allocation2] sm:$0x1]
  %v88 = vlaneseq
  %v89 = vshrl.u32 %v88, 7
  %v90 = vsub.s32 0, %v89
  %v91 = vrot.slane %v86, %v90
  %v93 = vadd.f32 %v70, %v91
  %v94 = vadd.f32 %v75, %v91
  %v95 = vadd.f32 %v80, %v91
  %v96 = vadd.f32 %v85, %v91
  %vm97 = vcmask 7168
  %98 = vst.msk [vmem:[%s3] sm:$0xff] %vm97, %v93
  %99 = vst.msk [vmem:[%s3 + $0x8] sm:$0xff] %vm97, %v94
  %100 = vst.msk [vmem:[%s3 + $0x10] sm:$0xff] %vm97, %v95
  %101 = vst.msk [vmem:[%s3 + $0x18] sm:$0xff] %vm97, %v96
  // Predicated region
  $region14: #{discriminator_forward.9} parent=0 // pred_check
    _
  $region15: #{discriminator_forward.9} parent=0 // pred_check_branch
    %103 = sbr.rel (0) target = $region17
  $region16: #{discriminator_forward.9} parent=0 // pred_region
    _
  $region17: #{discriminator_forward.9} parent=0 // pred_fallthru
    _
  // Predicated region
  $region18: #{discriminator_forward.9} parent=0 // pred_check
    _
  $region19: #{discriminator_forward.9} parent=0 // pred_check_branch
    %105 = sbr.rel (0) target = $region21
  $region20: #{discriminator_forward.9} parent=0 // pred_region
    _
  $region21: #{discriminator_forward.9} parent=0 // pred_fallthru
    _

</llo_original>
